<compile_context>
chip_gen: v6e
topology: v6e:2x2x1
jax: 0.10.0
libtpu: 0.0.40
codegen_flags: <defaults>
</compile_context>

<pallas_src>
import functools

import jax
import jax.numpy as jnp
from jax.experimental import pallas as pl
from jax.experimental.pallas import tpu as pltpu


def _cdiv(a, b):
    return -(-a // b)


def _round_up(a, b):
    return _cdiv(a, b) * b


def focal_loss_kernel(x_ref, t_ref, out_ref, *, gamma, full_rows, rem, tile_rows):
    s = pl.program_id(0)          # parallel split (megacore)
    i = pl.program_id(1)          # reduction steps within the split

    @pl.when(i == 0)
    def _init():
        out_ref[...] = jnp.zeros_like(out_ref)

    x = x_ref[...].astype(jnp.float32)
    t = t_ref[...].astype(jnp.float32)

    # Shared transcendentals (1 exp + 1 log per element).
    e = jnp.exp(-jnp.abs(x))          # exp(-|x|)
    sp = jnp.log1p(e)                 # softplus(-|x|)
    xpos = jnp.maximum(x, 0.0)

    # Numerically-stable BCE-with-logits (== torch BCEWithLogits, 'none'):
    #   bce = max(x, 0) - x*t + log(1 + exp(-|x|))
    bce = xpos - x * t + sp

    # 1 - p = sigmoid(-x); clamping (1-p) to [1e-6, 1-1e-6] is identical to the
    # reference's clamp of p to [1e-6, 1-1e-6].
    one_m_p = jnp.where(x >= 0.0, e, 1.0) / (1.0 + e)
    one_m_p = jnp.clip(one_m_p, 1e-6, 1.0 - 1e-6)

    # focal_term = (1 - p) ** gamma, specialized at trace time.
    if gamma == 0.5:
        focal = jnp.sqrt(one_m_p)
    elif gamma == 1.0:
        focal = one_m_p
    elif gamma == 2.0:
        focal = one_m_p * one_m_p
    else:
        focal = jnp.exp(gamma * jnp.log(one_m_p))

    loss = focal * bce                # alpha folded into the wrapper epilogue

    # Mask out padded rows/cols (valid region is a row-major prefix).
    shape = x.shape                   # (tile_rows, W)
    row_ids = jax.lax.broadcasted_iota(jnp.int32, shape, 0)
    col_ids = jax.lax.broadcasted_iota(jnp.int32, shape, 1)
    grow = (s * pl.num_programs(1) + i) * tile_rows + row_ids
    mask = (grow < full_rows) | ((grow == full_rows) & (col_ids < rem))
    loss = jnp.where(mask, loss, 0.0)

    # Vreg-friendly partial accumulation: only sublane-block-wise VPU adds in
    # the inner loop; cross-lane reduce happens once, in the wrapper.
    w = shape[-1]
    out_ref[...] += loss.reshape(tile_rows // 8, 8, w).sum(axis=0)


def focal_loss(inputs, targets, alpha=1.0, gamma=0.5, *,
               lane_width=512, max_tile_rows=2048, num_splits=2):
    """Focal loss with mean reduction; returns a scalar float32."""
    assert inputs.shape == targets.shape
    total = int(inputs.size)
    w = int(lane_width)

    rows_needed = _cdiv(total, w)
    rows_per_split = _cdiv(rows_needed, num_splits)
    tile_rows = min(int(max_tile_rows), _round_up(rows_per_split, 8))
    steps = _cdiv(rows_per_split, tile_rows)
    padded_rows = num_splits * steps * tile_rows
    padded_total = padded_rows * w

    x = inputs.reshape(-1)
    t = targets.reshape(-1)
    if padded_total != total:
        x = jnp.pad(x, (0, padded_total - total))
        t = jnp.pad(t, (0, padded_total - total))
    x = x.reshape(padded_rows, w)
    t = t.reshape(padded_rows, w)

    kernel = functools.partial(
        focal_loss_kernel,
        gamma=float(gamma),
        full_rows=total // w,
        rem=total % w,
        tile_rows=tile_rows,
    )

    partials = pl.pallas_call(
        kernel,
        out_shape=jax.ShapeDtypeStruct((num_splits, 8, w), jnp.float32),
        grid_spec=pltpu.PrefetchScalarGridSpec(
            num_scalar_prefetch=0,
            grid=(num_splits, steps),
            in_specs=[
                pl.BlockSpec((tile_rows, w), lambda s, i: (s * steps + i, 0)),
                pl.BlockSpec((tile_rows, w), lambda s, i: (s * steps + i, 0)),
            ],
            out_specs=pl.BlockSpec((None, 8, w), lambda s, i: (s, 0, 0)),
        ),
        compiler_params=pltpu.CompilerParams(
            dimension_semantics=("parallel", "arbitrary"),
        ),
    )(x, t)

    # Tiny epilogue: reduce per-core vreg partials, fold alpha, take the mean.
    return jnp.sum(partials) * (float(alpha) / float(total))


def focal_loss_ref(inputs, targets, alpha=1.0, gamma=0.5):
    """Plain-JAX reference mirroring the PyTorch forward."""
    x = inputs.astype(jnp.float32)
    t = targets.astype(jnp.float32)
    bce = jnp.maximum(x, 0.0) - x * t + jnp.log1p(jnp.exp(-jnp.abs(x)))
    p = jnp.clip(jax.nn.sigmoid(x), 1e-6, 1.0 - 1e-6)
    loss = alpha * (1.0 - p) ** gamma * bce
    return jnp.mean(loss)


if __name__ == "__main__":
    key = jax.random.PRNGKey(0)
    k1, k2 = jax.random.split(key)

    batch, num_classes = 16, 128
    logits = jax.random.normal(k1, (batch, num_classes), dtype=jnp.float32) * 2.0
    targets = (jax.random.uniform(k2, (batch, num_classes)) < 0.3).astype(jnp.float32)

    out = focal_loss(logits, targets, alpha=1.0, gamma=0.5)
    out = jax.block_until_ready(out)

    ref = focal_loss_ref(logits, targets, alpha=1.0, gamma=0.5)
    assert jnp.allclose(out, ref, rtol=1e-5, atol=1e-6), (out, ref)

    # Also exercise a non-aligned shape to check padding/masking correctness.
    k3, k4 = jax.random.split(k1)
    logits2 = jax.random.normal(k3, (7, 37), dtype=jnp.float32) * 3.0
    targets2 = (jax.random.uniform(k4, (7, 37)) < 0.5).astype(jnp.float32)
    out2 = jax.block_until_ready(focal_loss(logits2, targets2, alpha=0.25, gamma=2.0))
    ref2 = focal_loss_ref(logits2, targets2, alpha=0.25, gamma=2.0)
    assert jnp.allclose(out2, ref2, rtol=1e-5, atol=1e-6), (out2, ref2)

    print("KERNEL_OK")
</pallas_src>

<mosaic_0001>
module attributes {stable_mosaic.version = 11 : i64} {
  func.func @focal_loss_kernel(%arg0: i32, %arg1: i32, %arg2: memref<8x512xf32, #tpu.memory_space<vmem>>, %arg3: memref<8x512xf32, #tpu.memory_space<vmem>>, %arg4: memref<1x8x512xf32, #tpu.memory_space<vmem>>) attributes {dimension_semantics = [#tpu.dimension_semantics<parallel>, #tpu.dimension_semantics<arbitrary>], iteration_bounds = array<i64: 2, 1>, scalar_prefetch = 0 : i64, scratch_operands = 0 : i64, tpu.core_type = #tpu.core_type<tc>, window_params = [{transform_indices = @transform_0, window_bounds = array<i64: 8, 512>}, {transform_indices = @transform_1, window_bounds = array<i64: 8, 512>}, {transform_indices = @transform_2, window_bounds = array<i64: 1, 8, 512>}]} {
    %c0_i32 = arith.constant 0 : i32
    %0 = arith.cmpi eq, %arg1, %c0_i32 : i32
    %1 = arith.extui %0 : i1 to i32
    %c0_i32_0 = arith.constant 0 : i32
    %2 = arith.cmpi ne, %1, %c0_i32_0 : i32
    scf.if %2 {
      %cst_20 = arith.constant 0.000000e+00 : f32
      %53 = vector.broadcast %cst_20 : f32 to vector<8x512xf32>
      %c0_21 = arith.constant 0 : index
      %c0_22 = arith.constant 0 : index
      %c0_23 = arith.constant 0 : index
      %54 = vector.load %arg4[%c0_21, %c0_22, %c0_23] : memref<1x8x512xf32, #tpu.memory_space<vmem>>, vector<1x8x512xf32>
      %55 = vector.shape_cast %54 : vector<1x8x512xf32> to vector<8x512xf32>
      %56 = vector.shape_cast %53 : vector<8x512xf32> to vector<1x8x512xf32>
      tpu.vector_store %arg4[%c0_21, %c0_22, %c0_23], %56 {strides = array<i32>} : memref<1x8x512xf32, #tpu.memory_space<vmem>>, vector<1x8x512xf32>,
    } else {
    }
    %c0 = arith.constant 0 : index
    %c0_1 = arith.constant 0 : index
    %3 = vector.load %arg2[%c0, %c0_1] : memref<8x512xf32, #tpu.memory_space<vmem>>, vector<8x512xf32>
    %c0_2 = arith.constant 0 : index
    %c0_3 = arith.constant 0 : index
    %4 = vector.load %arg3[%c0_2, %c0_3] : memref<8x512xf32, #tpu.memory_space<vmem>>, vector<8x512xf32>
    %5 = math.absf %3 : vector<8x512xf32>
    %cst = arith.constant 0.000000e+00 : f32
    %6 = vector.broadcast %cst : f32 to vector<8x512xf32>
    %7 = arith.subf %6, %5 : vector<8x512xf32>
    %8 = math.exp %7 : vector<8x512xf32>
    %9 = math.log1p %8 : vector<8x512xf32>
    %cst_4 = arith.constant 0.000000e+00 : f32
    %10 = vector.broadcast %cst_4 : f32 to vector<8x512xf32>
    %11 = arith.maximumf %3, %10 : vector<8x512xf32>
    %12 = arith.mulf %3, %4 : vector<8x512xf32>
    %13 = arith.subf %11, %12 : vector<8x512xf32>
    %14 = arith.addf %13, %9 : vector<8x512xf32>
    %cst_5 = arith.constant 0.000000e+00 : f32
    %15 = vector.broadcast %cst_5 : f32 to vector<8x512xf32>
    %16 = arith.cmpf oge, %3, %15 : vector<8x512xf32>
    %cst_6 = arith.constant 1.000000e+00 : f32
    %17 = vector.broadcast %cst_6 : f32 to vector<8x512xf32>
    %18 = arith.select %16, %8, %17 : vector<8x512xi1>, vector<8x512xf32>
    %cst_7 = arith.constant 1.000000e+00 : f32
    %19 = vector.broadcast %cst_7 : f32 to vector<8x512xf32>
    %20 = arith.addf %19, %8 : vector<8x512xf32>
    %21 = arith.divf %18, %20 : vector<8x512xf32>
    %cst_8 = arith.constant 9.99999997E-7 : f32
    %cst_9 = arith.constant 0.999998986 : f32
    %22 = vector.broadcast %cst_8 : f32 to vector<8x512xf32>
    %23 = arith.maximumf %22, %21 : vector<8x512xf32>
    %24 = vector.broadcast %cst_9 : f32 to vector<8x512xf32>
    %25 = arith.minimumf %24, %23 : vector<8x512xf32>
    %26 = math.sqrt %25 : vector<8x512xf32>
    %27 = arith.mulf %26, %14 : vector<8x512xf32>
    %28 = tpu.iota {dimensions = array<i32: 0>} : vector<8x512xi32>
    %29 = tpu.iota {dimensions = array<i32: 1>} : vector<8x512xi32>
    %c1_i32 = arith.constant 1 : i32
    %30 = arith.muli %arg0, %c1_i32 : i32
    %31 = arith.addi %30, %arg1 : i32
    %c8_i32 = arith.constant 8 : i32
    %32 = arith.muli %31, %c8_i32 : i32
    %33 = vector.broadcast %32 : i32 to vector<8x512xi32>
    %34 = arith.addi %33, %28 : vector<8x512xi32>
    %c4_i32 = arith.constant 4 : i32
    %35 = vector.broadcast %c4_i32 : i32 to vector<8x512xi32>
    %36 = arith.cmpi slt, %34, %35 : vector<8x512xi32>
    %c4_i32_10 = arith.constant 4 : i32
    %37 = vector.broadcast %c4_i32_10 : i32 to vector<8x512xi32>
    %38 = arith.cmpi eq, %34, %37 : vector<8x512xi32>
    %c0_i32_11 = arith.constant 0 : i32
    %39 = vector.broadcast %c0_i32_11 : i32 to vector<8x512xi32>
    %40 = arith.cmpi slt, %29, %39 : vector<8x512xi32>
    %41 = arith.andi %38, %40 : vector<8x512xi1>
    %42 = arith.ori %36, %41 : vector<8x512xi1>
    %cst_12 = arith.constant 0.000000e+00 : f32
    %43 = vector.broadcast %cst_12 : f32 to vector<8x512xf32>
    %44 = arith.select %42, %27, %43 : vector<8x512xi1>, vector<8x512xf32>
    %c0_13 = arith.constant 0 : index
    %c0_14 = arith.constant 0 : index
    %c0_15 = arith.constant 0 : index
    %45 = vector.load %arg4[%c0_13, %c0_14, %c0_15] : memref<1x8x512xf32, #tpu.memory_space<vmem>>, vector<1x8x512xf32>
    %46 = vector.shape_cast %45 : vector<1x8x512xf32> to vector<8x512xf32>
    %47 = vector.shape_cast %44 : vector<8x512xf32> to vector<1x8x512xf32>
    %cst_16 = arith.constant dense<0.000000e+00> : vector<8x512xf32>
    %48 = vector.multi_reduction <add>, %47, %cst_16 [0] : vector<1x8x512xf32> to vector<8x512xf32>
    %49 = arith.addf %46, %48 : vector<8x512xf32>
    %c0_17 = arith.constant 0 : index
    %c0_18 = arith.constant 0 : index
    %c0_19 = arith.constant 0 : index
    %50 = vector.load %arg4[%c0_17, %c0_18, %c0_19] : memref<1x8x512xf32, #tpu.memory_space<vmem>>, vector<1x8x512xf32>
    %51 = vector.shape_cast %50 : vector<1x8x512xf32> to vector<8x512xf32>
    %52 = vector.shape_cast %49 : vector<8x512xf32> to vector<1x8x512xf32>
    tpu.vector_store %arg4[%c0_17, %c0_18, %c0_19], %52 {strides = array<i32>} : memref<1x8x512xf32, #tpu.memory_space<vmem>>, vector<1x8x512xf32>,
    return
  }
  func.func @transform_0(%arg0: i32, %arg1: i32) -> (i32, i32) {
    %c1_i32 = arith.constant 1 : i32
    %0 = arith.muli %arg0, %c1_i32 : i32
    %1 = arith.addi %0, %arg1 : i32
    %c0_i32 = arith.constant 0 : i32
    %c0_i32_0 = arith.constant 0 : i32
    return %1, %c0_i32 : i32, i32
  }
  func.func @transform_1(%arg0: i32, %arg1: i32) -> (i32, i32) {
    %c1_i32 = arith.constant 1 : i32
    %0 = arith.muli %arg0, %c1_i32 : i32
    %1 = arith.addi %0, %arg1 : i32
    %c0_i32 = arith.constant 0 : i32
    %c0_i32_0 = arith.constant 0 : i32
    return %1, %c0_i32 : i32, i32
  }
  func.func @transform_2(%arg0: i32, %arg1: i32) -> (i32, i32, i32) {
    %c0_i32 = arith.constant 0 : i32
    %c0_i32_0 = arith.constant 0 : i32
    %c0_i32_1 = arith.constant 0 : i32
    return %arg0, %c0_i32, %c0_i32_0 : i32, i32, i32
  }
}

</mosaic_0001>

<llo_original>
// kernel: tpu_custom_call.1
$region0: #{tpu_custom_call.1}
  #allocation0 [shape = 'u32[]', space=smem, size = 0x4, offset = 0x4, fixed_abs, tag = 'smem constant byte address 0x4 - core index']
  #allocation1 [shape = 'u32[144,128]{1,0:T(1,128)}', space=vmem, size = 0x12000, scoped, tag = 'internal scratch']
  %s0 = inlined_call_operand.hbm [shape: f32[16,512], index: 0, kind: input, shape index: {}]
  %s1 = inlined_call_operand.hbm [shape: f32[16,512], index: 1, kind: input, shape index: {}]
  %s2 = inlined_call_operand.hbm [shape: f32[2,8,512], index: 2, kind: output, shape index: {}]
  %s3 = sld [smem:[#allocation0]]
  $region53: #{tpu_custom_call.1} parent=0
    _
  %s5 = ssub.s32 1, %s3
  %s6 = scalar_select 0, %s5, %s3
  $region1: #{tpu_custom_call.1} parent=0
    #allocation2 [shape = 'u8[32768]{0}', space=vmem, size = 0x8000, scoped, tag = 'input window, operand 0']
    #allocation3 [shape = 's32[2]{0}', space=sflag, size = 0x8, scoped, tag = 'scoped memory for tpu_custom_call.1']
    #allocation4 [shape = 's32[2]{0}', space=sflag, size = 0x8, scoped, tag = 'scoped memory for tpu_custom_call.1']
    #allocation5 [shape = 'u8[32768]{0}', space=vmem, size = 0x8000, scoped, tag = 'input window, operand 1']
    #allocation6 [shape = 's32[2]{0}', space=sflag, size = 0x8, scoped, tag = 'scoped memory for tpu_custom_call.1']
    #allocation7 [shape = 'u8[32768]{0}', space=vmem, size = 0x8000, scoped, tag = 'output window, operand 0']
    %7 = vsyncpa [#allocation3], 0
    %s8 = scalar_lea.sflag [#allocation3], 1
    %9 = vsyncpa %s8, 0
    %10 = vsyncpa [#allocation6], 0
    %s11 = scalar_lea.sflag [#allocation6], 1
    %12 = vsyncpa %s11, 0
    %13 = vsyncpa [#allocation4], 0
    %s14 = scalar_lea.sflag [#allocation4], 1
    %15 = vsyncpa %s14, 0
    loop: start=0, step=1, limit=4
    $region2: #{tpu_custom_call.1} parent=1 // loop_pre_header
      _
    $region3: #{tpu_custom_call.1} parent=1 // loop_header
      %s17 = sphi 0, %s21
      %p18 = scmp.ge.s32.totalorder %s17, 4
      %s24 = sphi 0, %s36
      %s25 = sphi 0, %s32
      %s26 = sphi 0, %s24
      %s27 = sphi 0, %s25
      %s28 = sphi 0, %s26
      %s29 = sphi 0, %s27
      %s41 = sphi 0, %s43
      %s44 = sphi 0, %s41
      %s45 = sphi 0, %s44
      %s61 = sphi 0, %s45
      %s69 = sphi 0, %s71
      %s72 = sphi 0, %s69
      %s73 = sphi 0, %s72
      %s89 = sphi 0, %s73
      %s95 = sphi 0, %s97
      %s98 = sphi 0, %s95
      %s99 = sphi 0, %s98
      %s115 = sphi 0, %s99
    $region4: #{tpu_custom_call.1} parent=1 // loop_header_branch
      %20 = sbr.rel (%p18) target = $region8
    $region5: #{tpu_custom_call.1} parent=1 // loop_body
      %s22 = ssub.s32 %s17, 1
      %s23 = ssub.s32 %s17, 2
      %s30 = sadd.s32 1, %s25
      %p31 = scmp.ge.s32.totalorder %s30, 1
      %s32 = scalar_select %p31, 0, %s30
      %s33 = sadd.s32 1, %s24
      %s34 = scalar_select %p31, %s33, %s24
      %p35 = scmp.ge.s32.totalorder %s34, 2
      %s36 = scalar_select %p35, 0, %s34
      %s37 = sadd.s32 %s24, %s25
      %s38 = sadd.s32 %s36, %s32
      %s39 = ssub.s32 %s37, %s38
      %p40 = scmp.eq.s32.totalorder %s39, 0
      %s42 = sadd.s32 %s41, 1
      %s43 = scalar_select %p40, %s41, %s42
      %p46 = pneg %p40
      %p47 = scmp.eq.s32.totalorder %s17, 1
      %p48 = por %p46, %p47
      %p49 = scmp.ne.s32.totalorder %s41, %s44
      %p50 = scmp.eq.s32.totalorder %s17, 0
      %p51 = por %p49, %p50
      %p52 = scmp.ne.s32.totalorder %s41, %s44
      %p53 = scmp.eq.s32.totalorder %s22, 1
      %p54 = por %p52, %p53
      %p55 = scmp.ne.s32.totalorder %s44, %s45
      %p56 = scmp.eq.s32.totalorder %s22, 0
      %p57 = por %p55, %p56
      %p58 = scmp.ne.s32.totalorder %s44, %s45
      %p59 = scmp.eq.s32.totalorder %s23, 1
      %p60 = por %p58, %p59
      %p62 = scmp.ne.s32.totalorder %s45, %s61
      %p63 = scmp.eq.s32.totalorder %s23, 0
      %p64 = por %p62, %p63
      %s65 = sadd.s32 %s24, %s25
      %s66 = sadd.s32 %s36, %s32
      %s67 = ssub.s32 %s65, %s66
      %p68 = scmp.eq.s32.totalorder %s67, 0
      %s70 = sadd.s32 %s69, 1
      %s71 = scalar_select %p68, %s69, %s70
      %p74 = pneg %p68
      %p75 = scmp.eq.s32.totalorder %s17, 1
      %p76 = por %p74, %p75
      %p77 = scmp.ne.s32.totalorder %s69, %s72
      %p78 = scmp.eq.s32.totalorder %s17, 0
      %p79 = por %p77, %p78
      %p80 = scmp.ne.s32.totalorder %s69, %s72
      %p81 = scmp.eq.s32.totalorder %s22, 1
      %p82 = por %p80, %p81
      %p83 = scmp.ne.s32.totalorder %s72, %s73
      %p84 = scmp.eq.s32.totalorder %s22, 0
      %p85 = por %p83, %p84
      %p86 = scmp.ne.s32.totalorder %s72, %s73
      %p87 = scmp.eq.s32.totalorder %s23, 1
      %p88 = por %p86, %p87
      %p90 = scmp.ne.s32.totalorder %s73, %s89
      %p91 = scmp.eq.s32.totalorder %s23, 0
      %p92 = por %p90, %p91
      %s93 = ssub.s32 %s24, %s36
      %p94 = scmp.eq.s32.totalorder %s93, 0
      %s96 = sadd.s32 %s95, 1
      %s97 = scalar_select %p94, %s95, %s96
      %p100 = pneg %p94
      %p101 = scmp.eq.s32.totalorder %s17, 1
      %p102 = por %p100, %p101
      %p103 = scmp.ne.s32.totalorder %s95, %s98
      %p104 = scmp.eq.s32.totalorder %s17, 0
      %p105 = por %p103, %p104
      %p106 = scmp.ne.s32.totalorder %s95, %s98
      %p107 = scmp.eq.s32.totalorder %s22, 1
      %p108 = por %p106, %p107
      %p109 = scmp.ne.s32.totalorder %s98, %s99
      %p110 = scmp.eq.s32.totalorder %s22, 0
      %p111 = por %p109, %p110
      %p112 = scmp.ne.s32.totalorder %s98, %s99
      %p113 = scmp.eq.s32.totalorder %s23, 1
      %p114 = por %p112, %p113
      %p116 = scmp.ne.s32.totalorder %s99, %s115
      %p117 = scmp.eq.s32.totalorder %s23, 0
      %p118 = por %p116, %p117
      %p119 = scmp.le.s32.totalorder 1, %s17
      %p120 = scmp.lt.s32.totalorder %s17, 3
      %p121 = pnand %p119, %p120
      %p122 = pneg %p121
      // Predicated region
      $region9: #{tpu_custom_call.1} parent=5 // pred_check
        _
      $region10: #{tpu_custom_call.1} parent=5 // pred_check_branch
        %124 = sbr.rel (%p121) target = $region12
      $region11: #{tpu_custom_call.1} parent=5 // pred_region
        %s125 = ssub.s32 %s17, 1
      $region12: #{tpu_custom_call.1} parent=5 // pred_fallthru
        _
      %p126 = scmp.lt.s32.totalorder %s17, 2
      // Predicated region
      $region13: #{tpu_custom_call.1} parent=5 // pred_check
        %p127 = pneg %p126
      $region14: #{tpu_custom_call.1} parent=5 // pred_check_branch
        %129 = sbr.rel (%p127) target = $region16
      $region15: #{tpu_custom_call.1} parent=5 // pred_region
        // Predicated region
        $region17: #{tpu_custom_call.1} parent=15 // pred_check
          %p130 = pneg %p51
        $region18: #{tpu_custom_call.1} parent=15 // pred_check_branch
          %132 = sbr.rel (%p130) target = $region20
        $region19: #{tpu_custom_call.1} parent=15 // pred_region
          %s133 = sand.u32 %s41, 1
          %s134 = scalar_lea.sflag [#allocation3], %s133
          %s135 = sand.u32 %s41, 1
          %s136 = smul.addr %s135, 32
          %s137 = scalar_lea.vmem [#allocation2], %s136
          %s138 = sadd.s32 %s24, %s25
          %s140 = ssub.s32 512, 512
          %141 = vsyncadd %s134, %s140
          %s142 = smul.addr %s138, 4
          %s143 = smul.addr %s142, 128
          %s144 = scalar_lea.hbm %s0, %s143
          %s146 = sshll.u32 %s137, 4
          %s147 = int_to_ptr.vmem [resolvable:$true] %s146
          %149 = dma.hbm_to_vmem [thread:$0]  %s144, 512, %s147, %s134
        $region20: #{tpu_custom_call.1} parent=15 // pred_fallthru
          _
        // Predicated region
        $region21: #{tpu_custom_call.1} parent=15 // pred_check
          %p150 = pneg %p79
        $region22: #{tpu_custom_call.1} parent=15 // pred_check_branch
          %152 = sbr.rel (%p150) target = $region24
        $region23: #{tpu_custom_call.1} parent=15 // pred_region
          %s153 = sand.u32 %s69, 1
          %s154 = scalar_lea.sflag [#allocation6], %s153
          %s155 = sand.u32 %s69, 1
          %s156 = smul.addr %s155, 32
          %s157 = scalar_lea.vmem [#allocation5], %s156
          %s158 = sadd.s32 %s24, %s25
          %s160 = ssub.s32 512, 512
          %161 = vsyncadd %s154, %s160
          %s162 = smul.addr %s158, 4
          %s163 = smul.addr %s162, 128
          %s164 = scalar_lea.hbm %s1, %s163
          %s166 = sshll.u32 %s157, 4
          %s167 = int_to_ptr.vmem [resolvable:$true] %s166
          %169 = dma.hbm_to_vmem [thread:$0]  %s164, 512, %s167, %s154
        $region24: #{tpu_custom_call.1} parent=15 // pred_fallthru
          _
      $region16: #{tpu_custom_call.1} parent=5 // pred_fallthru
        _
      %p170 = scmp.le.s32.totalorder 1, %s17
      %p171 = scmp.lt.s32.totalorder %s17, 3
      %p172 = pnand %p170, %p171
      %p173 = pneg %p172
      // Predicated region
      $region25: #{tpu_custom_call.1} parent=5 // pred_check
        _
      $region26: #{tpu_custom_call.1} parent=5 // pred_check_branch
        %175 = sbr.rel (%p172) target = $region28
      $region27: #{tpu_custom_call.1} parent=5 // pred_region
        %s176 = ssub.s32 %s17, 1
        %s177 = sand.u32 %s44, 1
        %s178 = scalar_lea.sflag [#allocation3], %s177
        %s179 = sand.u32 %s44, 1
        %s180 = smul.addr %s179, 32
        %s181 = scalar_lea.vmem [#allocation2], %s180
        // Predicated region
        $region29: #{tpu_custom_call.1} parent=27 // pred_check
          %p182 = pneg %p57
        $region30: #{tpu_custom_call.1} parent=27 // pred_check_branch
          %184 = sbr.rel (%p182) target = $region32
        $region31: #{tpu_custom_call.1} parent=27 // pred_region
          %185 = dma.done %s178, 512
        $region32: #{tpu_custom_call.1} parent=27 // pred_fallthru
          _
        %s186 = sand.u32 %s72, 1
        %s187 = scalar_lea.sflag [#allocation6], %s186
        %s188 = sand.u32 %s72, 1
        %s189 = smul.addr %s188, 32
        %s190 = scalar_lea.vmem [#allocation5], %s189
        // Predicated region
        $region33: #{tpu_custom_call.1} parent=27 // pred_check
          %p191 = pneg %p85
        $region34: #{tpu_custom_call.1} parent=27 // pred_check_branch
          %193 = sbr.rel (%p191) target = $region36
        $region35: #{tpu_custom_call.1} parent=27 // pred_region
          %194 = dma.done %s187, 512
        $region36: #{tpu_custom_call.1} parent=27 // pred_fallthru
          _
        %s195 = sand.u32 %s44, 1
        %s196 = scalar_lea.sflag [#allocation3], %s195
        %s197 = sand.u32 %s44, 1
        %s198 = smul.addr %s197, 32
        %s199 = scalar_lea.vmem [#allocation2], %s198
        %p200 = pneg %p57
        %p201 = pneg %p54
        %s202 = sand.u32 %s72, 1
        %s203 = scalar_lea.sflag [#allocation6], %s202
        %s204 = sand.u32 %s72, 1
        %s205 = smul.addr %s204, 32
        %s206 = scalar_lea.vmem [#allocation5], %s205
        %p207 = pneg %p85
        %p208 = pneg %p82
        %p209 = pneg %p111
        %p210 = pneg %p108
        %s211 = sand.u32 %s98, 1
        %s212 = scalar_lea.sflag [#allocation4], %s211
        %s213 = sand.u32 %s98, 1
        %s214 = smul.addr %s213, 32
        %s215 = scalar_lea.vmem [#allocation7], %s214
        %s216 = sadd.s32 %s26, %s27
        %s217 = sadd.s32 %s26, %s27
        %p218 = scmp.eq.s32.totalorder %s27, 0
        // Predicated region
        $region37: #{tpu_custom_call.1} parent=27 // pred_check
          %p219 = pneg %p218
        $region38: #{tpu_custom_call.1} parent=27 // pred_check_branch
          %221 = sbr.rel (%p219) target = $region40
        $region39: #{tpu_custom_call.1} parent=27 // pred_region
          %222 = vst [vmem:[%s215] sm:$0xff] 0.0
          %223 = vst [vmem:[%s215 + $0x8] sm:$0xff] 0.0
          %224 = vst [vmem:[%s215 + $0x10] sm:$0xff] 0.0
          %225 = vst [vmem:[%s215 + $0x18] sm:$0xff] 0.0
        $region40: #{tpu_custom_call.1} parent=27 // pred_fallthru
          _
        %v226 = vld [vmem:[%s181] sm:$0xff]
        %v227 = vld [vmem:[%s181 + $0x8] sm:$0xff]
        %v228 = vld [vmem:[%s181 + $0x10] sm:$0xff]
        %v229 = vld [vmem:[%s181 + $0x18] sm:$0xff]
        %v230 = vld [vmem:[%s190] sm:$0xff]
        %v231 = vld [vmem:[%s190 + $0x8] sm:$0xff]
        %v232 = vld [vmem:[%s190 + $0x10] sm:$0xff]
        %v233 = vld [vmem:[%s190 + $0x18] sm:$0xff]
        %v234 = vand.u32 2147483647, %v226
        %v235 = vand.u32 2147483647, %v227
        %v236 = vand.u32 2147483647, %v228
        %v237 = vand.u32 2147483647, %v229
        %v238 = vsub.f32 0.0, %v234
        %v239 = vsub.f32 0.0, %v235
        %v240 = vsub.f32 0.0, %v236
        %v241 = vsub.f32 0.0, %v237
        %v242 = vmul.f32 %v238, 1.442695
        %v243 = vpow.pop %v242
        %v244 = vmul.f32 %v239, 1.442695
        %v245 = vpow.pop %v244
        %v246 = vmul.f32 %v240, 1.442695
        %v247 = vpow.pop %v246
        %v248 = vmul.f32 %v241, 1.442695
        %v249 = vpow.pop %v248
        %v250 = vadd.f32 %v243, 1.0
        %v251 = vlog2.pop %v250
        %v252 = vmul.f32 %v251, 0.6931472
        %v253 = vmul.f32 -0.5, %v243
        %v254 = vadd.f32 %v253, 1.0
        %v255 = vmul.f32 %v254, %v243
        %v256 = vand.u32 2147483647, %v243
        %vm257 = vcmp.lt.f32.partialorder %v256, 0.0004427343
        %v258 = vsel %vm257, %v255, %v252
        %v259 = vadd.f32 %v245, 1.0
        %v260 = vlog2.pop %v259
        %v261 = vmul.f32 %v260, 0.6931472
        %v262 = vmul.f32 -0.5, %v245
        %v263 = vadd.f32 %v262, 1.0
        %v264 = vmul.f32 %v263, %v245
        %v265 = vand.u32 2147483647, %v245
        %vm266 = vcmp.lt.f32.partialorder %v265, 0.0004427343
        %v267 = vsel %vm266, %v264, %v261
        %v268 = vadd.f32 %v247, 1.0
        %v269 = vlog2.pop %v268
        %v270 = vmul.f32 %v269, 0.6931472
        %v271 = vmul.f32 -0.5, %v247
        %v272 = vadd.f32 %v271, 1.0
        %v273 = vmul.f32 %v272, %v247
        %v274 = vand.u32 2147483647, %v247
        %vm275 = vcmp.lt.f32.partialorder %v274, 0.0004427343
        %v276 = vsel %vm275, %v273, %v270
        %v277 = vadd.f32 %v249, 1.0
        %v278 = vlog2.pop %v277
        %v279 = vmul.f32 %v278, 0.6931472
        %v280 = vmul.f32 -0.5, %v249
        %v281 = vadd.f32 %v280, 1.0
        %v282 = vmul.f32 %v281, %v249
        %v283 = vand.u32 2147483647, %v249
        %vm284 = vcmp.lt.f32.partialorder %v283, 0.0004427343
        %v285 = vsel %vm284, %v282, %v279
        %v286 = vmax.f32 %v226, 0.0
        %v287 = vmax.f32 %v227, 0.0
        %v288 = vmax.f32 %v228, 0.0
        %v289 = vmax.f32 %v229, 0.0
        %v290 = vmul.f32 %v226, %v230
        %v291 = vmul.f32 %v227, %v231
        %v292 = vmul.f32 %v228, %v232
        %v293 = vmul.f32 %v229, %v233
        %v294 = vsub.f32 %v286, %v290
        %v295 = vsub.f32 %v287, %v291
        %v296 = vsub.f32 %v288, %v292
        %v297 = vsub.f32 %v289, %v293
        %v298 = vadd.f32 %v294, %v258
        %v299 = vadd.f32 %v295, %v267
        %v300 = vadd.f32 %v296, %v276
        %v301 = vadd.f32 %v297, %v285
        %vm302 = vcmp.ge.f32.partialorder %v226, 0.0
        %vm303 = vcmp.ge.f32.partialorder %v227, 0.0
        %vm304 = vcmp.ge.f32.partialorder %v228, 0.0
        %vm305 = vcmp.ge.f32.partialorder %v229, 0.0
        %v306 = vsel %vm302, %v243, 1.0
        %v307 = vsel %vm303, %v245, 1.0
        %v308 = vsel %vm304, %v247, 1.0
        %v309 = vsel %vm305, %v249, 1.0
        %v310 = vadd.f32 %v243, 1.0
        %v311 = vadd.f32 %v245, 1.0
        %v312 = vadd.f32 %v247, 1.0
        %v313 = vadd.f32 %v249, 1.0
        %v314 = vrcp.pop %v310
        %v315 = vmul.f32 %v306, %v314
        %v316 = vrcp.pop %v311
        %v317 = vmul.f32 %v307, %v316
        %v318 = vrcp.pop %v312
        %v319 = vmul.f32 %v308, %v318
        %v320 = vrcp.pop %v313
        %v321 = vmul.f32 %v309, %v320
        %v322 = vmax.f32 %v315, 1e-06
        %v323 = vmax.f32 %v317, 1e-06
        %v324 = vmax.f32 %v319, 1e-06
        %v325 = vmax.f32 %v321, 1e-06
        %v326 = vmin.f32 %v322, 0.999999
        %v327 = vmin.f32 %v323, 0.999999
        %v328 = vmin.f32 %v324, 0.999999
        %v329 = vmin.f32 %v325, 0.999999
        %v330 = vrsqrt.pop %v326
        %v331 = vmul.f32 %v326, %v330
        %vm332 = vcmp.eq.f32.partialorder %v326, inf
        %v333 = vsel %vm332, %v326, %v331
        %vm334 = vcmp.eq.f32.partialorder %v326, 0.0
        %v335 = vand.u32 %v326, 2147483648
        %v336 = vsel %vm334, %v335, %v333
        %v337 = vrsqrt.pop %v327
        %v338 = vmul.f32 %v327, %v337
        %vm339 = vcmp.eq.f32.partialorder %v327, inf
        %v340 = vsel %vm339, %v327, %v338
        %vm341 = vcmp.eq.f32.partialorder %v327, 0.0
        %v342 = vand.u32 %v327, 2147483648
        %v343 = vsel %vm341, %v342, %v340
        %v344 = vrsqrt.pop %v328
        %v345 = vmul.f32 %v328, %v344
        %vm346 = vcmp.eq.f32.partialorder %v328, inf
        %v347 = vsel %vm346, %v328, %v345
        %vm348 = vcmp.eq.f32.partialorder %v328, 0.0
        %v349 = vand.u32 %v328, 2147483648
        %v350 = vsel %vm348, %v349, %v347
        %v351 = vrsqrt.pop %v329
        %v352 = vmul.f32 %v329, %v351
        %vm353 = vcmp.eq.f32.partialorder %v329, inf
        %v354 = vsel %vm353, %v329, %v352
        %vm355 = vcmp.eq.f32.partialorder %v329, 0.0
        %v356 = vand.u32 %v329, 2147483648
        %v357 = vsel %vm355, %v356, %v354
        %v358 = vmul.f32 %v336, %v298
        %v359 = vmul.f32 %v343, %v299
        %v360 = vmul.f32 %v350, %v300
        %v361 = vmul.f32 %v357, %v301
        %v362 = vlaneseq
        %v363 = vshrl.u32 %v362, 7
        %v364 = vlaneseq
        %v365 = vand.u32 %v364, 127
        %v366 = vadd.s32 %v365, 128
        %v367 = vadd.s32 %v365, 256
        %v368 = vadd.s32 %v365, 384
        %s369 = sadd.s32 %s26, %s27
        %s370 = smul.u32 %s369, 8
        %v371 = vstv %s370
        %v372 = vadd.s32 %v371, %v363
        %vm373 = vcmp.lt.s32.totalorder %v372, 4
        %vm374 = vcmp.eq.s32.totalorder %v372, 4
        %vm375 = vcmp.lt.s32.totalorder %v365, 0
        %vm376 = vcmp.lt.s32.totalorder %v366, 0
        %vm377 = vcmp.lt.s32.totalorder %v367, 0
        %vm378 = vcmp.lt.s32.totalorder %v368, 0
        %vm379 = vmand %vm374, %vm375
        %vm380 = vmand %vm374, %vm376
        %vm381 = vmand %vm374, %vm377
        %vm382 = vmand %vm374, %vm378
        %vm383 = vmor %vm373, %vm379
        %vm384 = vmor %vm373, %vm380
        %vm385 = vmor %vm373, %vm381
        %vm386 = vmor %vm373, %vm382
        %v387 = vsel %vm383, %v358, 0.0
        %v388 = vsel %vm384, %v359, 0.0
        %v389 = vsel %vm385, %v360, 0.0
        %v390 = vsel %vm386, %v361, 0.0
        %v391 = vld [vmem:[%s215] sm:$0xff]
        %v392 = vld [vmem:[%s215 + $0x8] sm:$0xff]
        %v393 = vld [vmem:[%s215 + $0x10] sm:$0xff]
        %v394 = vld [vmem:[%s215 + $0x18] sm:$0xff]
        %v395 = vadd.f32 %v387, 0.0
        %v396 = vadd.f32 %v388, 0.0
        %v397 = vadd.f32 %v389, 0.0
        %v398 = vadd.f32 %v390, 0.0
        %v399 = vadd.f32 %v391, %v395
        %v400 = vadd.f32 %v392, %v396
        %v401 = vadd.f32 %v393, %v397
        %v402 = vadd.f32 %v394, %v398
        %403 = vst [vmem:[%s215] sm:$0xff] %v399
        %404 = vst [vmem:[%s215 + $0x8] sm:$0xff] %v400
        %405 = vst [vmem:[%s215 + $0x10] sm:$0xff] %v401
        %406 = vst [vmem:[%s215 + $0x18] sm:$0xff] %v402
        %s407 = sand.u32 %s98, 1
        %s408 = scalar_lea.sflag [#allocation4], %s407
        %s409 = sand.u32 %s98, 1
        %s410 = smul.addr %s409, 32
        %s411 = scalar_lea.vmem [#allocation7], %s410
        // Predicated region
        $region41: #{tpu_custom_call.1} parent=27 // pred_check
          %p412 = pneg %p108
        $region42: #{tpu_custom_call.1} parent=27 // pred_check_branch
          %414 = sbr.rel (%p412) target = $region44
        $region43: #{tpu_custom_call.1} parent=27 // pred_region
          %s416 = ssub.s32 512, 512
          %417 = vsyncadd %s408, %s416
          %s418 = smul.addr %s26, 4
          %s419 = smul.addr %s418, 128
          %s420 = scalar_lea.hbm %s2, %s419
          %s422 = sshll.u32 %s411, 4
          %s423 = int_to_ptr.vmem [resolvable:$true] %s422
          %425 = dma.vmem_to_hbm [thread:$0]  %s423, 512, %s420, %s408
        $region44: #{tpu_custom_call.1} parent=27 // pred_fallthru
          _
      $region28: #{tpu_custom_call.1} parent=5 // pred_fallthru
        _
      %p426 = scmp.le.s32.totalorder 2, %s17
      // Predicated region
      $region45: #{tpu_custom_call.1} parent=5 // pred_check
        %p427 = pneg %p426
      $region46: #{tpu_custom_call.1} parent=5 // pred_check_branch
        %429 = sbr.rel (%p427) target = $region48
      $region47: #{tpu_custom_call.1} parent=5 // pred_region
        %s430 = ssub.s32 %s17, 2
        // Predicated region
        $region49: #{tpu_custom_call.1} parent=47 // pred_check
          %p431 = pneg %p114
        $region50: #{tpu_custom_call.1} parent=47 // pred_check_branch
          %433 = sbr.rel (%p431) target = $region52
        $region51: #{tpu_custom_call.1} parent=47 // pred_region
          %s434 = sand.u32 %s99, 1
          %s435 = scalar_lea.sflag [#allocation4], %s434
          %s436 = sand.u32 %s99, 1
          %s437 = smul.addr %s436, 32
          %s438 = scalar_lea.vmem [#allocation7], %s437
          %439 = dma.done %s435, 512
        $region52: #{tpu_custom_call.1} parent=47 // pred_fallthru
          _
      $region48: #{tpu_custom_call.1} parent=5 // pred_fallthru
        _
    $region6: #{tpu_custom_call.1} parent=1 // loop_footer
      %s21 = sadd.s32 1, %s17
    $region7: #{tpu_custom_call.1} parent=1 // loop_footer_branch
      %16 = sbr.rel target = $region3
    $region8: #{tpu_custom_call.1} parent=1 // loop_exit
      _
    %440 = vsyncpa [#allocation3], 1
    %s441 = scalar_lea.sflag [#allocation3], 1
    %442 = vsyncpa %s441, 1
    %443 = vsyncpa [#allocation6], 1
    %s444 = scalar_lea.sflag [#allocation6], 1
    %445 = vsyncpa %s444, 1
    %446 = vsyncpa [#allocation4], 1
    %s447 = scalar_lea.sflag [#allocation4], 1
    %448 = vsyncpa %s447, 1

</llo_original>
